<compile_context>
chip_gen: v5e
topology: v5e:2x2
jax: 0.10.0
libtpu: 0.0.40
codegen_flags: <defaults>
</compile_context>

<pallas_src>
import functools

import jax
import jax.numpy as jnp
from jax.experimental import pallas as pl
from jax.experimental.pallas import tpu as pltpu

_LANE = 128
_VMEM_LIMIT_BYTES = 48 * 1024 * 1024   # explicit scoped-VMEM limit (v7x-safe, > defaults)
_VMEM_TILE_BUDGET = 24 * 1024 * 1024   # target footprint of the pipelined blocks
_MAX_LANES = 65536                     # cap on spatial lanes per grid step
_NB_CAP = 8                            # max images packed into one block (static unroll)


def _round_up(a, m):
    return ((a + m - 1) // m) * m


# ----------------------------------------------------------------------------------------
# Pass 1: per-block partial statistics of x (Gram matrix + per-channel row sum).
# All conv/BN statistics are derived from these later:
#   sum_c = (W @ rowsum)_c ,   E[y_c^2] = (W G W^T)_{cc}
# ----------------------------------------------------------------------------------------
def _stats_kernel(x_ref, gram_ref, rsum_ref, *, nb):
    # Zero the resident accumulator blocks on the first step of the reduction (t) axis.
    @pl.when(pl.program_id(2) == 0)
    def _():
        gram_ref[...] = jnp.zeros_like(gram_ref)
        rsum_ref[...] = jnp.zeros_like(rsum_ref)

    cin = x_ref.shape[1]
    g = jnp.zeros((cin, cin), jnp.float32)
    r = jnp.zeros((cin, 1), jnp.float32)
    for b in range(nb):                            # nb is small & static (unrolled)
        xb = x_ref[b]                              # (Cin, tile_s), native dtype -> MXU
        g = g + jnp.einsum('cs,ds->cd', xb, xb,
                           preferred_element_type=jnp.float32)
        r = r + jnp.sum(xb.astype(jnp.float32), axis=-1, keepdims=True)
    gram_ref[...] += g[None, None]
    rsum_ref[...] += r[None, None]


# ----------------------------------------------------------------------------------------
# Pass 2: y = W @ x (recomputed, never stored to HBM), y*scale + shift, ReLU.
# ----------------------------------------------------------------------------------------
def _norm_kernel(x_ref, w_ref, scale_ref, shift_ref, out_ref, *, nb):
    w = w_ref[...]                                 # (Cout, Cin), x's dtype
    scale = scale_ref[...]                         # (Cout, 1) f32
    shift = shift_ref[...]                         # (Cout, 1) f32
    for b in range(nb):
        xb = x_ref[b]                              # (Cin, tile_s)
        y = jnp.dot(w, xb, preferred_element_type=jnp.float32)   # (Cout, tile_s) f32
        out_ref[b] = jnp.maximum(y * scale + shift, 0.0).astype(out_ref.dtype)


def _plan_tiles(N, Cin, Cout, S, x_bytes, out_bytes):
    """VMEM-budget-driven tile plan."""
    # Per spatial lane per grid step: x & out blocks are double-buffered by the pipeline,
    # plus roughly one f32 copy of each inside the kernel body.
    per_lane = 2 * (Cin * x_bytes + Cout * out_bytes) + 4 * (Cin + Cout)
    max_lanes = (_VMEM_TILE_BUDGET // per_lane) // _LANE * _LANE
    max_lanes = int(min(max(max_lanes, _LANE), _MAX_LANES))

    s_ceil = _round_up(S, _LANE)
    if s_ceil <= max_lanes:
        # Whole image in one tile; pack several images per block when S is small.
        tile_s = s_ceil
        nb = int(max(1, min(N, _NB_CAP, max_lanes // tile_s)))
        s_pad = tile_s
    else:
        nb = 1
        tile_s = max_lanes
        s_pad = _round_up(S, tile_s)
    num_tiles = s_pad // tile_s
    n_pad = _round_up(N, nb)
    n_blocks = n_pad // nb
    # Split the spatial-tile axis into two "parallel" halves when possible so the stats
    # pass can use both v7x TensorCores even at batch 1.
    t_split = 2 if (num_tiles % 2 == 0 and num_tiles >= 2) else 1
    t_inner = num_tiles // t_split
    return nb, tile_s, s_pad, num_tiles, n_pad, n_blocks, t_split, t_inner


def dr_forward(x_nchw, conv_w, gamma, beta, *, eps=1e-5):
    """relu(batchnorm(conv1x1(x))) with BN batch statistics (PyTorch training mode)."""
    N, Cin, H, W = x_nchw.shape
    Cout, cin_w, kh, kw = conv_w.shape
    assert cin_w == Cin and kh == 1 and kw == 1
    S = H * W

    x_dtype = x_nchw.dtype
    out_dtype = x_dtype                            # stream output in the native dtype too
    x_bytes = jnp.dtype(x_dtype).itemsize
    out_bytes = jnp.dtype(out_dtype).itemsize

    nb, tile_s, s_pad, num_tiles, n_pad, n_blocks, t_split, t_inner = _plan_tiles(
        N, Cin, Cout, S, x_bytes, out_bytes)

    # NCHW -> (N, Cin, S): pure reshape, spatial axis lane-dense.  Pad only if required
    # (zero columns/images contribute nothing to the statistics; padded outputs are
    # sliced off; inv_count uses the true pixel count).
    x3 = x_nchw.reshape(N, Cin, S)
    if s_pad != S or n_pad != N:
        x3 = jnp.pad(x3, ((0, n_pad - N), (0, 0), (0, s_pad - S)))

    w2 = conv_w.reshape(Cout, Cin).astype(x_dtype)   # (Cout, Cin), tiny cast
    inv_count = 1.0 / float(N * S)

    cparams_stats = pltpu.CompilerParams(
        dimension_semantics=("parallel", "parallel", "arbitrary"),
        vmem_limit_bytes=_VMEM_LIMIT_BYTES)
    cparams_norm = pltpu.CompilerParams(
        dimension_semantics=("parallel", "parallel"),
        vmem_limit_bytes=_VMEM_LIMIT_BYTES)

    # ---------------- pass 1: partial Gram / rowsum of x ----------------
    gram_parts, rsum_parts = pl.pallas_call(
        functools.partial(_stats_kernel, nb=nb),
        out_shape=(
            jax.ShapeDtypeStruct((n_blocks, t_split, Cin, Cin), jnp.float32),
            jax.ShapeDtypeStruct((n_blocks, t_split, Cin, 1), jnp.float32),
        ),
        grid=(n_blocks, t_split, t_inner),
        in_specs=[
            pl.BlockSpec((nb, Cin, tile_s),
                         lambda n, c, t, _ti=t_inner: (n, 0, c * _ti + t)),
        ],
        out_specs=(
            pl.BlockSpec((1, 1, Cin, Cin), lambda n, c, t: (n, c, 0, 0)),
            pl.BlockSpec((1, 1, Cin, 1), lambda n, c, t: (n, c, 0, 0)),
        ),
        compiler_params=cparams_stats,
    )(x3)

    # ---------------- finalize (tiny XLA): BN scale / shift ----------------
    G = jnp.sum(gram_parts, axis=(0, 1))                       # (Cin, Cin)
    rowsum = jnp.sum(rsum_parts, axis=(0, 1))                  # (Cin, 1)
    w32 = w2.astype(jnp.float32)
    mean = jnp.dot(w32, rowsum) * inv_count                    # (Cout, 1)
    ex2 = jnp.sum(jnp.dot(w32, G) * w32, axis=1, keepdims=True) * inv_count
    var = jnp.maximum(ex2 - mean * mean, 0.0)                  # biased var, clamped >= 0
    inv_std = jax.lax.rsqrt(var + jnp.float32(eps))
    scale = gamma.astype(jnp.float32).reshape(Cout, 1) * inv_std
    shift = beta.astype(jnp.float32).reshape(Cout, 1) - mean * scale

    # ---------------- pass 2: conv (recomputed) + affine + ReLU ----------------
    out3 = pl.pallas_call(
        functools.partial(_norm_kernel, nb=nb),
        out_shape=jax.ShapeDtypeStruct((n_pad, Cout, s_pad), out_dtype),
        grid=(n_blocks, num_tiles),
        in_specs=[
            pl.BlockSpec((nb, Cin, tile_s), lambda n, t: (n, 0, t)),
            pl.BlockSpec((Cout, Cin), lambda n, t: (0, 0)),
            pl.BlockSpec((Cout, 1), lambda n, t: (0, 0)),
            pl.BlockSpec((Cout, 1), lambda n, t: (0, 0)),
        ],
        out_specs=pl.BlockSpec((nb, Cout, tile_s), lambda n, t: (n, 0, t)),
        compiler_params=cparams_norm,
    )(x3, w2, scale, shift)

    # TODO(synk): BatchNorm2d running_mean/running_var momentum updates (training-time
    # side effect that does not affect this forward's output) are not computed.
    return out3[:N, :, :S].reshape(N, Cout, H, W)


def _reference(x_nchw, conv_w, gamma, beta, eps=1e-5):
    # plain-JAX reference of the same training-mode forward
    Cout = conv_w.shape[0]
    w = conv_w[:, :, 0, 0]
    y = jnp.einsum('oc,nchw->nohw', w, x_nchw)
    mean = jnp.mean(y, axis=(0, 2, 3), keepdims=True)
    var = jnp.mean((y - mean) ** 2, axis=(0, 2, 3), keepdims=True)
    y = (y - mean) * jax.lax.rsqrt(var + eps)
    y = y * gamma.reshape(1, Cout, 1, 1) + beta.reshape(1, Cout, 1, 1)
    return jnp.maximum(y, 0.0)


if __name__ == "__main__":
    in_d, out_d = 4, 8
    N, H, W = 2, 16, 16

    key = jax.random.PRNGKey(0)
    kx, kw, kg, kb = jax.random.split(key, 4)

    x = jax.random.normal(kx, (N, in_d, H, W), dtype=jnp.float32)
    # deterministic synthetic parameters (shapes per nn.Conv2d / nn.BatchNorm2d)
    conv_w = 0.1 * jax.random.normal(kw, (out_d, in_d, 1, 1), dtype=jnp.float32)
    gamma = 1.0 + 0.05 * jax.random.normal(kg, (out_d,), dtype=jnp.float32)
    beta = 0.05 * jax.random.normal(kb, (out_d,), dtype=jnp.float32)

    fwd = jax.jit(dr_forward)
    out = jax.block_until_ready(fwd(x, conv_w, gamma, beta))

    ref = _reference(x, conv_w, gamma, beta)
    assert out.shape == (N, out_d, H, W)
    max_err = float(jnp.max(jnp.abs(out - ref)))
    assert jnp.allclose(out, ref, atol=1e-4, rtol=1e-4), max_err

    print("KERNEL_OK")
</pallas_src>

<mosaic_0001>
module attributes {stable_mosaic.version = 11 : i64} {
  func.func @_stats_kernel(%arg0: i32, %arg1: i32, %arg2: i32, %arg3: memref<2x4x256xf32, #tpu.memory_space<vmem>>, %arg4: memref<1x1x4x4xf32, #tpu.memory_space<vmem>>, %arg5: memref<1x1x4x1xf32, #tpu.memory_space<vmem>>) attributes {dimension_semantics = [#tpu.dimension_semantics<parallel>, #tpu.dimension_semantics<parallel>, #tpu.dimension_semantics<arbitrary>], iteration_bounds = array<i64: 1, 1, 1>, scalar_prefetch = 0 : i64, scratch_operands = 0 : i64, tpu.core_type = #tpu.core_type<tc>, window_params = [{transform_indices = @transform_0, window_bounds = array<i64: 2, 4, 256>}, {transform_indices = @transform_1, window_bounds = array<i64: 1, 1, 4, 4>}, {transform_indices = @transform_2, window_bounds = array<i64: 1, 1, 4, 1>}]} {
    %c0_i32 = arith.constant 0 : i32
    %0 = arith.cmpi eq, %arg2, %c0_i32 : i32
    %1 = arith.extui %0 : i1 to i32
    %c0_i32_0 = arith.constant 0 : i32
    %2 = arith.cmpi ne, %1, %c0_i32_0 : i32
    scf.if %2 {
      %cst_26 = arith.constant 0.000000e+00 : f32
      %27 = vector.broadcast %cst_26 : f32 to vector<1x1x4x4xf32>
      %c0_27 = arith.constant 0 : index
      %c0_28 = arith.constant 0 : index
      %c0_29 = arith.constant 0 : index
      %c0_30 = arith.constant 0 : index
      %28 = vector.load %arg4[%c0_27, %c0_28, %c0_29, %c0_30] : memref<1x1x4x4xf32, #tpu.memory_space<vmem>>, vector<1x1x4x4xf32>
      tpu.vector_store %arg4[%c0_27, %c0_28, %c0_29, %c0_30], %27 {strides = array<i32>} : memref<1x1x4x4xf32, #tpu.memory_space<vmem>>, vector<1x1x4x4xf32>,
      %cst_31 = arith.constant 0.000000e+00 : f32
      %29 = vector.broadcast %cst_31 : f32 to vector<1x1x4x1xf32>
      %c0_32 = arith.constant 0 : index
      %c0_33 = arith.constant 0 : index
      %c0_34 = arith.constant 0 : index
      %c0_35 = arith.constant 0 : index
      %30 = vector.load %arg5[%c0_32, %c0_33, %c0_34, %c0_35] : memref<1x1x4x1xf32, #tpu.memory_space<vmem>>, vector<1x1x4x1xf32>
      tpu.vector_store %arg5[%c0_32, %c0_33, %c0_34, %c0_35], %29 {strides = array<i32>} : memref<1x1x4x1xf32, #tpu.memory_space<vmem>>, vector<1x1x4x1xf32>,
    } else {
    }
    %cst = arith.constant 0.000000e+00 : f32
    %3 = vector.broadcast %cst : f32 to vector<4x4xf32>
    %cst_1 = arith.constant 0.000000e+00 : f32
    %4 = vector.broadcast %cst_1 : f32 to vector<4x1xf32>
    %c0 = arith.constant 0 : index
    %c0_2 = arith.constant 0 : index
    %c0_3 = arith.constant 0 : index
    %5 = vector.load %arg3[%c0, %c0_2, %c0_3] : memref<2x4x256xf32, #tpu.memory_space<vmem>>, vector<1x4x256xf32>
    %6 = vector.shape_cast %5 : vector<1x4x256xf32> to vector<4x256xf32>
    "tpu.trace_start"() <{level = 10 : i32, message = "cs,ds->cd"}> : () -> ()
    %cst_4 = arith.constant dense<0.000000e+00> : vector<4x4xf32>
    %7 = tpu.matmul %6, %6, %cst_4 {dimension_numbers = #tpu.dot_dimension_numbers<[1], [1], [0], [0], [0, 0, 1, 0], [], []>} : vector<4x256xf32>, vector<4x256xf32>, vector<4x4xf32> -> vector<4x4xf32>
    "tpu.trace_stop"() : () -> ()
    %8 = arith.addf %3, %7 : vector<4x4xf32>
    %cst_5 = arith.constant dense<0.000000e+00> : vector<4xf32>
    %9 = vector.multi_reduction <add>, %6, %cst_5 [1] : vector<4x256xf32> to vector<4xf32>
    %10 = vector.shape_cast %9 : vector<4xf32> to vector<4x1xf32>
    %11 = arith.addf %4, %10 : vector<4x1xf32>
    %c1 = arith.constant 1 : index
    %c0_6 = arith.constant 0 : index
    %c0_7 = arith.constant 0 : index
    %12 = vector.load %arg3[%c1, %c0_6, %c0_7] : memref<2x4x256xf32, #tpu.memory_space<vmem>>, vector<1x4x256xf32>
    %13 = vector.shape_cast %12 : vector<1x4x256xf32> to vector<4x256xf32>
    "tpu.trace_start"() <{level = 10 : i32, message = "cs,ds->cd"}> : () -> ()
    %cst_8 = arith.constant dense<0.000000e+00> : vector<4x4xf32>
    %14 = tpu.matmul %13, %13, %cst_8 {dimension_numbers = #tpu.dot_dimension_numbers<[1], [1], [0], [0], [0, 0, 1, 0], [], []>} : vector<4x256xf32>, vector<4x256xf32>, vector<4x4xf32> -> vector<4x4xf32>
    "tpu.trace_stop"() : () -> ()
    %15 = arith.addf %8, %14 : vector<4x4xf32>
    %cst_9 = arith.constant dense<0.000000e+00> : vector<4xf32>
    %16 = vector.multi_reduction <add>, %13, %cst_9 [1] : vector<4x256xf32> to vector<4xf32>
    %17 = vector.shape_cast %16 : vector<4xf32> to vector<4x1xf32>
    %18 = arith.addf %11, %17 : vector<4x1xf32>
    %c0_10 = arith.constant 0 : index
    %c0_11 = arith.constant 0 : index
    %c0_12 = arith.constant 0 : index
    %c0_13 = arith.constant 0 : index
    %19 = vector.load %arg4[%c0_10, %c0_11, %c0_12, %c0_13] : memref<1x1x4x4xf32, #tpu.memory_space<vmem>>, vector<1x1x4x4xf32>
    %20 = vector.shape_cast %15 : vector<4x4xf32> to vector<1x1x4x4xf32>
    %21 = arith.addf %19, %20 : vector<1x1x4x4xf32>
    %c0_14 = arith.constant 0 : index
    %c0_15 = arith.constant 0 : index
    %c0_16 = arith.constant 0 : index
    %c0_17 = arith.constant 0 : index
    %22 = vector.load %arg4[%c0_14, %c0_15, %c0_16, %c0_17] : memref<1x1x4x4xf32, #tpu.memory_space<vmem>>, vector<1x1x4x4xf32>
    tpu.vector_store %arg4[%c0_14, %c0_15, %c0_16, %c0_17], %21 {strides = array<i32>} : memref<1x1x4x4xf32, #tpu.memory_space<vmem>>, vector<1x1x4x4xf32>,
    %c0_18 = arith.constant 0 : index
    %c0_19 = arith.constant 0 : index
    %c0_20 = arith.constant 0 : index
    %c0_21 = arith.constant 0 : index
    %23 = vector.load %arg5[%c0_18, %c0_19, %c0_20, %c0_21] : memref<1x1x4x1xf32, #tpu.memory_space<vmem>>, vector<1x1x4x1xf32>
    %24 = vector.shape_cast %18 : vector<4x1xf32> to vector<1x1x4x1xf32>
    %25 = arith.addf %23, %24 : vector<1x1x4x1xf32>
    %c0_22 = arith.constant 0 : index
    %c0_23 = arith.constant 0 : index
    %c0_24 = arith.constant 0 : index
    %c0_25 = arith.constant 0 : index
    %26 = vector.load %arg5[%c0_22, %c0_23, %c0_24, %c0_25] : memref<1x1x4x1xf32, #tpu.memory_space<vmem>>, vector<1x1x4x1xf32>
    tpu.vector_store %arg5[%c0_22, %c0_23, %c0_24, %c0_25], %25 {strides = array<i32>} : memref<1x1x4x1xf32, #tpu.memory_space<vmem>>, vector<1x1x4x1xf32>,
    return
  }
  func.func @transform_0(%arg0: i32, %arg1: i32, %arg2: i32) -> (i32, i32, i32) {
    %c1_i32 = arith.constant 1 : i32
    %0 = arith.muli %arg1, %c1_i32 : i32
    %1 = arith.addi %0, %arg2 : i32
    %c0_i32 = arith.constant 0 : i32
    %c0_i32_0 = arith.constant 0 : i32
    return %arg0, %c0_i32, %1 : i32, i32, i32
  }
  func.func @transform_1(%arg0: i32, %arg1: i32, %arg2: i32) -> (i32, i32, i32, i32) {
    %c0_i32 = arith.constant 0 : i32
    %c0_i32_0 = arith.constant 0 : i32
    %c0_i32_1 = arith.constant 0 : i32
    return %arg0, %arg1, %c0_i32, %c0_i32_0 : i32, i32, i32, i32
  }
  func.func @transform_2(%arg0: i32, %arg1: i32, %arg2: i32) -> (i32, i32, i32, i32) {
    %c0_i32 = arith.constant 0 : i32
    %c0_i32_0 = arith.constant 0 : i32
    %c0_i32_1 = arith.constant 0 : i32
    return %arg0, %arg1, %c0_i32, %c0_i32_0 : i32, i32, i32, i32
  }
}

module attributes {stable_mosaic.version = 11 : i64} {
  func.func @_norm_kernel(%arg0: i32, %arg1: i32, %arg2: memref<2x4x256xf32, #tpu.memory_space<vmem>>, %arg3: memref<8x4xf32, #tpu.memory_space<vmem>>, %arg4: memref<8x1xf32, #tpu.memory_space<vmem>>, %arg5: memref<8x1xf32, #tpu.memory_space<vmem>>, %arg6: memref<2x8x256xf32, #tpu.memory_space<vmem>>) attributes {dimension_semantics = [#tpu.dimension_semantics<parallel>, #tpu.dimension_semantics<parallel>], iteration_bounds = array<i64: 1, 1>, scalar_prefetch = 0 : i64, scratch_operands = 0 : i64, tpu.core_type = #tpu.core_type<tc>, window_params = [{transform_indices = @transform_0, window_bounds = array<i64: 2, 4, 256>}, {pipeline_mode = #tpu.pipeline_mode<synchronous>, transform_indices = @transform_1, window_bounds = array<i64: 8, 4>}, {pipeline_mode = #tpu.pipeline_mode<synchronous>, transform_indices = @transform_2, window_bounds = array<i64: 8, 1>}, {pipeline_mode = #tpu.pipeline_mode<synchronous>, transform_indices = @transform_3, window_bounds = array<i64: 8, 1>}, {transform_indices = @transform_4, window_bounds = array<i64: 2, 8, 256>}]} {
    %c0 = arith.constant 0 : index
    %c0_0 = arith.constant 0 : index
    %0 = vector.load %arg3[%c0, %c0_0] : memref<8x4xf32, #tpu.memory_space<vmem>>, vector<8x4xf32>
    %c0_1 = arith.constant 0 : index
    %c0_2 = arith.constant 0 : index
    %1 = vector.load %arg4[%c0_1, %c0_2] : memref<8x1xf32, #tpu.memory_space<vmem>>, vector<8x1xf32>
    %c0_3 = arith.constant 0 : index
    %c0_4 = arith.constant 0 : index
    %2 = vector.load %arg5[%c0_3, %c0_4] : memref<8x1xf32, #tpu.memory_space<vmem>>, vector<8x1xf32>
    %c0_5 = arith.constant 0 : index
    %c0_6 = arith.constant 0 : index
    %c0_7 = arith.constant 0 : index
    %3 = vector.load %arg2[%c0_5, %c0_6, %c0_7] : memref<2x4x256xf32, #tpu.memory_space<vmem>>, vector<1x4x256xf32>
    %4 = vector.shape_cast %3 : vector<1x4x256xf32> to vector<4x256xf32>
    %cst = arith.constant dense<0.000000e+00> : vector<8x256xf32>
    %5 = tpu.matmul %0, %4, %cst {dimension_numbers = #tpu.dot_dimension_numbers<[1], [0], [0], [1], [0, 0, 1, 1], [], []>} : vector<8x4xf32>, vector<4x256xf32>, vector<8x256xf32> -> vector<8x256xf32>
    %6 = vector.broadcast %1 : vector<8x1xf32> to vector<8x256xf32>
    %7 = arith.mulf %5, %6 : vector<8x256xf32>
    %8 = vector.broadcast %2 : vector<8x1xf32> to vector<8x256xf32>
    %9 = arith.addf %7, %8 : vector<8x256xf32>
    %cst_8 = arith.constant 0.000000e+00 : f32
    %10 = vector.broadcast %cst_8 : f32 to vector<8x256xf32>
    %11 = arith.maximumf %9, %10 : vector<8x256xf32>
    %c0_9 = arith.constant 0 : index
    %c0_10 = arith.constant 0 : index
    %c0_11 = arith.constant 0 : index
    %12 = vector.load %arg6[%c0_9, %c0_10, %c0_11] : memref<2x8x256xf32, #tpu.memory_space<vmem>>, vector<1x8x256xf32>
    %13 = vector.shape_cast %12 : vector<1x8x256xf32> to vector<8x256xf32>
    %14 = vector.shape_cast %11 : vector<8x256xf32> to vector<1x8x256xf32>
    tpu.vector_store %arg6[%c0_9, %c0_10, %c0_11], %14 {strides = array<i32>} : memref<2x8x256xf32, #tpu.memory_space<vmem>>, vector<1x8x256xf32>,
    %c1 = arith.constant 1 : index
    %c0_12 = arith.constant 0 : index
    %c0_13 = arith.constant 0 : index
    %15 = vector.load %arg2[%c1, %c0_12, %c0_13] : memref<2x4x256xf32, #tpu.memory_space<vmem>>, vector<1x4x256xf32>
    %16 = vector.shape_cast %15 : vector<1x4x256xf32> to vector<4x256xf32>
    %cst_14 = arith.constant dense<0.000000e+00> : vector<8x256xf32>
    %17 = tpu.matmul %0, %16, %cst_14 {dimension_numbers = #tpu.dot_dimension_numbers<[1], [0], [0], [1], [0, 0, 1, 1], [], []>} : vector<8x4xf32>, vector<4x256xf32>, vector<8x256xf32> -> vector<8x256xf32>
    %18 = vector.broadcast %1 : vector<8x1xf32> to vector<8x256xf32>
    %19 = arith.mulf %17, %18 : vector<8x256xf32>
    %20 = vector.broadcast %2 : vector<8x1xf32> to vector<8x256xf32>
    %21 = arith.addf %19, %20 : vector<8x256xf32>
    %cst_15 = arith.constant 0.000000e+00 : f32
    %22 = vector.broadcast %cst_15 : f32 to vector<8x256xf32>
    %23 = arith.maximumf %21, %22 : vector<8x256xf32>
    %c1_16 = arith.constant 1 : index
    %c0_17 = arith.constant 0 : index
    %c0_18 = arith.constant 0 : index
    %24 = vector.load %arg6[%c1_16, %c0_17, %c0_18] : memref<2x8x256xf32, #tpu.memory_space<vmem>>, vector<1x8x256xf32>
    %25 = vector.shape_cast %24 : vector<1x8x256xf32> to vector<8x256xf32>
    %26 = vector.shape_cast %23 : vector<8x256xf32> to vector<1x8x256xf32>
    tpu.vector_store %arg6[%c1_16, %c0_17, %c0_18], %26 {strides = array<i32>} : memref<2x8x256xf32, #tpu.memory_space<vmem>>, vector<1x8x256xf32>,
    return
  }
  func.func @transform_0(%arg0: i32, %arg1: i32) -> (i32, i32, i32) {
    %c0_i32 = arith.constant 0 : i32
    %c0_i32_0 = arith.constant 0 : i32
    return %arg0, %c0_i32, %arg1 : i32, i32, i32
  }
  func.func @transform_1(%arg0: i32, %arg1: i32) -> (i32, i32) {
    %c0_i32 = arith.constant 0 : i32
    %c0_i32_0 = arith.constant 0 : i32
    %c0_i32_1 = arith.constant 0 : i32
    return %c0_i32, %c0_i32_0 : i32, i32
  }
  func.func @transform_2(%arg0: i32, %arg1: i32) -> (i32, i32) {
    %c0_i32 = arith.constant 0 : i32
    %c0_i32_0 = arith.constant 0 : i32
    %c0_i32_1 = arith.constant 0 : i32
    return %c0_i32, %c0_i32_0 : i32, i32
  }
  func.func @transform_3(%arg0: i32, %arg1: i32) -> (i32, i32) {
    %c0_i32 = arith.constant 0 : i32
    %c0_i32_0 = arith.constant 0 : i32
    %c0_i32_1 = arith.constant 0 : i32
    return %c0_i32, %c0_i32_0 : i32, i32
  }
  func.func @transform_4(%arg0: i32, %arg1: i32) -> (i32, i32, i32) {
    %c0_i32 = arith.constant 0 : i32
    %c0_i32_0 = arith.constant 0 : i32
    return %arg0, %c0_i32, %arg1 : i32, i32, i32
  }
}

</mosaic_0001>

<llo_original>
// kernel: dr_forward.2
$region0: #{dr_forward.2}
  #allocation0 [shape = 'u32[]', space=smem, size = 0x4, offset = 0x4, fixed_abs, tag = 'smem constant byte address 0x4 - core index']
  #allocation1 [shape = 'u32[72,128]{1,0:T(1,128)}', space=vmem, size = 0x9000, scoped, tag = 'internal scratch']
  %s0 = inlined_call_operand.vmem [shape: f32[2,4,256], index: 0, kind: input, shape index: {}]
  %s1 = inlined_call_operand.vmem [shape: f32[1,1,4,4], index: 1, kind: output, shape index: {0}]
  %s2 = inlined_call_operand.vmem [shape: f32[1,1,4,1], index: 2, kind: output, shape index: {1}]
  %3 = xla_tuple %s1, %s2
  %s4 = sld [smem:[#allocation0]]
  $region26: #{dr_forward.2} parent=0
    _
  %s6 = ssub.s32 1, %s4
  %s7 = scalar_select 0, %s6, %s4
  // Predicated region
  $region2: #{dr_forward.2} parent=0 // pred_check
    _
  $region3: #{dr_forward.2} parent=0 // pred_check_branch
    %9 = sbr.rel (0) target = $region5
  $region4: #{dr_forward.2} parent=0 // pred_region
    %s10 = sadd.s32 0, 0
    %s11 = smul.u32 2, %s10
    %p12 = scmp.lt.s32.totalorder %s11, 1
    %s13 = scalar_select %p12, %s11, 1
    %s14 = smul.addr %s13, 4
    %s15 = scalar_lea.vmem %s0, %s14
    %s16 = sadd.s32 0, 0
    %s17 = smul.u32 2, %s16
  $region5: #{dr_forward.2} parent=0 // pred_fallthru
    _
  %s18 = sadd.s32 0, 0
  %s19 = smul.u32 2, %s18
  %p20 = scmp.lt.s32.totalorder %s19, 1
  %s21 = scalar_select %p20, %s19, 1
  %s22 = smul.addr %s21, 4
  %s23 = scalar_lea.vmem %s0, %s22
  %s24 = sadd.s32 0, 0
  %s25 = smul.u32 2, %s24
  %p26 = scmp.lt.s32.totalorder %s25, 1
  %s27 = scalar_select %p26, %s25, 1
  %s28 = smul.addr %s27, 4
  %s29 = scalar_lea.vmem %s0, %s28
  %s30 = sadd.s32 0, 0
  %s31 = smul.u32 2, %s30
  %p32 = scmp.eq.s32.totalorder 0, 0
  // Predicated region
  $region6: #{dr_forward.2} parent=0 // pred_check
    %p33 = pneg %p32
  $region7: #{dr_forward.2} parent=0 // pred_check_branch
    %35 = sbr.rel (%p33) target = $region9
  $region8: #{dr_forward.2} parent=0 // pred_region
    %vm36 = vcmask 27648
    %37 = vst.msk [vmem:[%s1] sm:$0xf] %vm36, 0.0
    %vm38 = vcmask 3072
    %39 = vst.msk [vmem:[%s2] sm:$0xf] %vm38, 0.0
  $region9: #{dr_forward.2} parent=0 // pred_fallthru
    _
  %v40 = vld [vmem:[%s29] sm:$0xff]
  %42 = vst [vmem:[#allocation1] ss:$2 sm:$0xff] %v40
  %v43 = vld.sshfl [vmem:[#allocation1] sm:$0xff pattern:$0x75316420]
  %v44 = vld.sshfl [vmem:[#allocation1 + $0x8] sm:$0xff pattern:$0x75316420]
  %vm47 = vcmask 1043456
  %v48 = vsel %vm47, %v43, 0.0
  %v49 = vsel %vm47, %v44, 0.0
  %v50 = vadd.f32 %v48, %v49
  %51 = vadd.xlane.f32.xlu0 %v50
  %v52 = vpop.xlane.xlu0 %51
  %v53 = vadd.f32 %v52, 0.0
  %s54 = scalar_lea.vmem %s29, 8
  %v55 = vld [vmem:[%s54] sm:$0xff]
  %57 = vst [vmem:[#allocation1] ss:$2 sm:$0xff] %v55
  %v58 = vld.sshfl [vmem:[#allocation1] sm:$0xff pattern:$0x75316420]
  %v59 = vld.sshfl [vmem:[#allocation1 + $0x8] sm:$0xff pattern:$0x75316420]
  %62 = vst [vmem:[#allocation1] ss:$2 sm:$0xff] %v55
  %v63 = vld.sshfl [vmem:[#allocation1] sm:$0xff pattern:$0x75316420]
  %v64 = vld.sshfl [vmem:[#allocation1 + $0x8] sm:$0xff pattern:$0x75316420]
  %67 = vmatpush.xpose.msra.mxu0 0.0
  %68 = vmatpush.xpose.msra.mxu0 0.0
  %69 = vmatpush.xpose.msra.mxu0 0.0
  %70 = vmatpush.xpose.msra.mxu0 0.0
  %71 = vmatpush.xpose.msra.mxu0 0.0
  %72 = vmatpush.xpose.msra.mxu0 0.0
  %73 = vmatpush.xpose.msra.mxu0 0.0
  %74 = vmatpush.xpose.msra.mxu0 0.0
  %75 = vmatpush.xpose.msra.mxu0 0.0
  %76 = vmatpush.xpose.msra.mxu0 0.0
  %77 = vmatpush.xpose.msra.mxu0 0.0
  %78 = vmatpush.xpose.msra.mxu0 0.0
  %79 = vmatpush.xpose.msra.mxu0 0.0
  %80 = vmatpush.xpose.msra.mxu0 0.0
  %81 = vmatpush.xpose.msra.mxu0 0.0
  %82 = vmatpush.xpose.msra.mxu0 %v63
  %83 = vmatmul.f32.gmra.mxu0 %v58
  %v84 = vpop.f32.mrf.mxu0
  %v85 = vadd.f32 0.0, %v84
  %86 = vdwg.mxu0
  %87 = vmatpush.xpose.msra.mxu0 0.0
  %88 = vmatpush.xpose.msra.mxu0 0.0
  %89 = vmatpush.xpose.msra.mxu0 0.0
  %90 = vmatpush.xpose.msra.mxu0 0.0
  %91 = vmatpush.xpose.msra.mxu0 0.0
  %92 = vmatpush.xpose.msra.mxu0 0.0
  %93 = vmatpush.xpose.msra.mxu0 0.0
  %94 = vmatpush.xpose.msra.mxu0 0.0
  %95 = vmatpush.xpose.msra.mxu0 0.0
  %96 = vmatpush.xpose.msra.mxu0 0.0
  %97 = vmatpush.xpose.msra.mxu0 0.0
  %98 = vmatpush.xpose.msra.mxu0 0.0
  %99 = vmatpush.xpose.msra.mxu0 0.0
  %100 = vmatpush.xpose.msra.mxu0 0.0
  %101 = vmatpush.xpose.msra.mxu0 0.0
  %102 = vmatpush.xpose.msra.mxu0 %v64
  %103 = vmatmul.f32.gmra.mxu0 %v59
  %v104 = vpop.f32.mrf.mxu0
  %v105 = vadd.f32 %v85, %v104
  %106 = vdwg.mxu0
  %107 = vst [vmem:[#allocation1] ss:$2 sm:$0xff] %v40
  %v108 = vld.sshfl [vmem:[#allocation1] sm:$0xff pattern:$0x75316420]
  %v109 = vld.sshfl [vmem:[#allocation1 + $0x8] sm:$0xff pattern:$0x75316420]
  %112 = vst [vmem:[#allocation1] ss:$2 sm:$0xff] %v40
  %v113 = vld.sshfl [vmem:[#allocation1] sm:$0xff pattern:$0x75316420]
  %v114 = vld.sshfl [vmem:[#allocation1 + $0x8] sm:$0xff pattern:$0x75316420]
  %117 = vmatpush.xpose.msra.mxu0 0.0
  %118 = vmatpush.xpose.msra.mxu0 0.0
  %119 = vmatpush.xpose.msra.mxu0 0.0
  %120 = vmatpush.xpose.msra.mxu0 0.0
  %121 = vmatpush.xpose.msra.mxu0 0.0
  %122 = vmatpush.xpose.msra.mxu0 0.0
  %123 = vmatpush.xpose.msra.mxu0 0.0
  %124 = vmatpush.xpose.msra.mxu0 0.0
  %125 = vmatpush.xpose.msra.mxu0 0.0
  %126 = vmatpush.xpose.msra.mxu0 0.0
  %127 = vmatpush.xpose.msra.mxu0 0.0
  %128 = vmatpush.xpose.msra.mxu0 0.0
  %129 = vmatpush.xpose.msra.mxu0 0.0
  %130 = vmatpush.xpose.msra.mxu0 0.0
  %131 = vmatpush.xpose.msra.mxu0 0.0
  %132 = vmatpush.xpose.msra.mxu0 %v113
  %133 = vmatmul.f32.gmra.mxu0 %v108
  %v134 = vpop.f32.mrf.mxu0
  %v135 = vadd.f32 %v105, %v134
  %136 = vdwg.mxu0
  %137 = vmatpush.xpose.msra.mxu0 0.0
  %138 = vmatpush.xpose.msra.mxu0 0.0
  %139 = vmatpush.xpose.msra.mxu0 0.0
  %140 = vmatpush.xpose.msra.mxu0 0.0
  %141 = vmatpush.xpose.msra.mxu0 0.0
  %142 = vmatpush.xpose.msra.mxu0 0.0
  %143 = vmatpush.xpose.msra.mxu0 0.0
  %144 = vmatpush.xpose.msra.mxu0 0.0
  %145 = vmatpush.xpose.msra.mxu0 0.0
  %146 = vmatpush.xpose.msra.mxu0 0.0
  %147 = vmatpush.xpose.msra.mxu0 0.0
  %148 = vmatpush.xpose.msra.mxu0 0.0
  %149 = vmatpush.xpose.msra.mxu0 0.0
  %150 = vmatpush.xpose.msra.mxu0 0.0
  %151 = vmatpush.xpose.msra.mxu0 0.0
  %152 = vmatpush.xpose.msra.mxu0 %v114
  %153 = vmatmul.f32.gmra.mxu0 %v109
  %v154 = vpop.f32.mrf.mxu0
  %v155 = vadd.f32 %v135, %v154
  %156 = vdwg.mxu0
  %157 = vst [vmem:[#allocation1] ss:$2 sm:$0xff] %v55
  %v158 = vld.sshfl [vmem:[#allocation1] sm:$0xff pattern:$0x75316420]
  %v159 = vld.sshfl [vmem:[#allocation1 + $0x8] sm:$0xff pattern:$0x75316420]
  %v162 = vsel %vm47, %v158, 0.0
  %v163 = vsel %vm47, %v159, 0.0
  %v164 = vadd.f32 %v162, %v163
  %165 = vadd.xlane.f32.xlu0 %v164
  %v166 = vpop.xlane.xlu0 %165
  %v167 = vadd.f32 %v53, %v166
  %v168 = vld [vmem:[%s1] sm:$0xf]
  %v169 = vadd.f32 %v168, %v155
  %vm170 = vcmask 27648
  %171 = vst.msk [vmem:[%s1] sm:$0xf] %vm170, %v169
  %v172 = vld [vmem:[%s2] sm:$0xf]
  %v173 = vadd.f32 %v172, %v167
  %vm174 = vcmask 3072
  %175 = vst.msk [vmem:[%s2] sm:$0xf] %vm174, %v173
  // Predicated region
  $region10: #{dr_forward.2} parent=0 // pred_check
    _
  $region11: #{dr_forward.2} parent=0 // pred_check_branch
    %177 = sbr.rel (0) target = $region13
  $region12: #{dr_forward.2} parent=0 // pred_region
    _
  $region13: #{dr_forward.2} parent=0 // pred_fallthru
    _
  // Predicated region
  $region14: #{dr_forward.2} parent=0 // pred_check
    _
  $region15: #{dr_forward.2} parent=0 // pred_check_branch
    %179 = sbr.rel (0) target = $region17
  $region16: #{dr_forward.2} parent=0 // pred_region
    _
  $region17: #{dr_forward.2} parent=0 // pred_fallthru
    _
  // Predicated region
  $region18: #{dr_forward.2} parent=0 // pred_check
    _
  $region19: #{dr_forward.2} parent=0 // pred_check_branch
    %181 = sbr.rel (0) target = $region21
  $region20: #{dr_forward.2} parent=0 // pred_region
    _
  $region21: #{dr_forward.2} parent=0 // pred_fallthru
    _
  // Predicated region
  $region22: #{dr_forward.2} parent=0 // pred_check
    _
  $region23: #{dr_forward.2} parent=0 // pred_check_branch
    %183 = sbr.rel (0) target = $region25
  $region24: #{dr_forward.2} parent=0 // pred_region
    _
  $region25: #{dr_forward.2} parent=0 // pred_fallthru
    _

// kernel: dr_forward.3
$region0: #{dr_forward.3}
  #allocation0 [shape = 'u32[]', space=smem, size = 0x4, offset = 0x4, fixed_abs, tag = 'smem constant byte address 0x4 - core index']
  #allocation1 [shape = 'u32[72,128]{1,0:T(1,128)}', space=vmem, size = 0x9000, scoped, tag = 'internal scratch']
  %s0 = inlined_call_operand.vmem [shape: f32[2,4,256], index: 0, kind: input, shape index: {}]
  %s1 = inlined_call_operand.vmem [shape: f32[8,4], index: 1, kind: input, shape index: {}]
  %s2 = inlined_call_operand.vmem [shape: f32[8,1], index: 2, kind: input, shape index: {}]
  %s3 = inlined_call_operand.vmem [shape: f32[8,1], index: 3, kind: input, shape index: {}]
  %s4 = inlined_call_operand.vmem [shape: f32[2,8,256], index: 4, kind: output, shape index: {}]
  %s5 = sld [smem:[#allocation0]]
  $region26: #{dr_forward.3} parent=0
    _
  %s7 = ssub.s32 1, %s5
  %s8 = scalar_select 0, %s7, %s5
  // Predicated region
  $region2: #{dr_forward.3} parent=0 // pred_check
    _
  $region3: #{dr_forward.3} parent=0 // pred_check_branch
    %10 = sbr.rel (0) target = $region5
  $region4: #{dr_forward.3} parent=0 // pred_region
    _
  $region5: #{dr_forward.3} parent=0 // pred_fallthru
    _
  // Predicated region
  $region6: #{dr_forward.3} parent=0 // pred_check
    _
  $region7: #{dr_forward.3} parent=0 // pred_check_branch
    %12 = sbr.rel (0) target = $region9
  $region8: #{dr_forward.3} parent=0 // pred_region
    _
  $region9: #{dr_forward.3} parent=0 // pred_fallthru
    _
  // Predicated region
  $region10: #{dr_forward.3} parent=0 // pred_check
    _
  $region11: #{dr_forward.3} parent=0 // pred_check_branch
    %14 = sbr.rel (0) target = $region13
  $region12: #{dr_forward.3} parent=0 // pred_region
    _
  $region13: #{dr_forward.3} parent=0 // pred_fallthru
    _
  // Predicated region
  $region14: #{dr_forward.3} parent=0 // pred_check
    _
  $region15: #{dr_forward.3} parent=0 // pred_check_branch
    %16 = sbr.rel (0) target = $region17
  $region16: #{dr_forward.3} parent=0 // pred_region
    _
  $region17: #{dr_forward.3} parent=0 // pred_fallthru
    _
  %v17 = vld [vmem:[%s1] sm:$0xff]
  %v18 = vld [vmem:[%s2] sm:$0xff]
  %v19 = vld [vmem:[%s3] sm:$0xff]
  %v20 = vld [vmem:[%s0] sm:$0xff]
  %22 = vst [vmem:[#allocation1] ss:$2 sm:$0xff] %v20
  %v23 = vld.sshfl [vmem:[#allocation1] sm:$0xff pattern:$0x75316420]
  %v24 = vld.sshfl [vmem:[#allocation1 + $0x8] sm:$0xff pattern:$0x75316420]
  %vm25 = vcmask 31744
  %v27 = vsel %vm25, %v17, 0
  %vm29 = vcmask 1043456
  %v30 = vsel %vm29, %v23, 0
  %v32 = vsel %vm29, %v24, 0
  %34 = vmatpush.msra.mxu0 0.0
  %35 = vmatpush.msra.mxu0 0.0
  %36 = vmatpush.msra.mxu0 0.0
  %37 = vmatpush.msra.mxu0 0.0
  %38 = vmatpush.msra.mxu0 0.0
  %39 = vmatpush.msra.mxu0 0.0
  %40 = vmatpush.msra.mxu0 0.0
  %41 = vmatpush.msra.mxu0 0.0
  %42 = vmatpush.msra.mxu0 0.0
  %43 = vmatpush.msra.mxu0 0.0
  %44 = vmatpush.msra.mxu0 0.0
  %45 = vmatpush.msra.mxu0 0.0
  %46 = vmatpush.msra.mxu0 0.0
  %47 = vmatpush.msra.mxu0 0.0
  %48 = vmatpush.msra.mxu0 0.0
  %49 = vmatpush.msra.mxu0 %v30
  %50 = vmatmul.f32.gmra.mxu0 %v27
  %v51 = vpop.f32.mrf.mxu0
  %v52 = vadd.f32 0.0, %v51
  %53 = vdwg.mxu0
  %54 = vmatpush.msra.mxu0 0.0
  %55 = vmatpush.msra.mxu0 0.0
  %56 = vmatpush.msra.mxu0 0.0
  %57 = vmatpush.msra.mxu0 0.0
  %58 = vmatpush.msra.mxu0 0.0
  %59 = vmatpush.msra.mxu0 0.0
  %60 = vmatpush.msra.mxu0 0.0
  %61 = vmatpush.msra.mxu0 0.0
  %62 = vmatpush.msra.mxu0 0.0
  %63 = vmatpush.msra.mxu0 0.0
  %64 = vmatpush.msra.mxu0 0.0
  %65 = vmatpush.msra.mxu0 0.0
  %66 = vmatpush.msra.mxu0 0.0
  %67 = vmatpush.msra.mxu0 0.0
  %68 = vmatpush.msra.mxu0 0.0
  %69 = vmatpush.msra.mxu0 %v32
  %70 = vmatmul.f32.gmra.mxu0 %v27
  %v71 = vpop.f32.mrf.mxu0
  %v72 = vadd.f32 0.0, %v71
  %73 = vdwg.mxu0
  %75 = vset.pattern.permute.xlu0 0
  %76 = vperm.xlu0 %75, %v18
  %v77 = vpop.permute.xlu0 %76
  %v79 = vmul.f32 %v52, %v77
  %v80 = vmul.f32 %v72, %v77
  %82 = vset.pattern.permute.xlu0 0
  %83 = vperm.xlu0 %82, %v19
  %v84 = vpop.permute.xlu0 %83
  %v86 = vadd.f32 %v79, %v84
  %v87 = vadd.f32 %v80, %v84
  %v88 = vmax.f32 %v86, 0.0
  %v89 = vmax.f32 %v87, 0.0
  %90 = vst [vmem:[%s4] sm:$0xff] %v88
  %91 = vst [vmem:[%s4 + $0x8] sm:$0xff] %v89
  %s92 = scalar_lea.vmem %s0, 8
  %v93 = vld [vmem:[%s92] sm:$0xff]
  %95 = vst [vmem:[#allocation1] ss:$2 sm:$0xff] %v93
  %v96 = vld.sshfl [vmem:[#allocation1] sm:$0xff pattern:$0x75316420]
  %v97 = vld.sshfl [vmem:[#allocation1 + $0x8] sm:$0xff pattern:$0x75316420]
  %v98 = vsel %vm29, %v96, 0
  %v100 = vsel %vm29, %v97, 0
  %102 = vmatpush.msra.mxu0 0.0
  %103 = vmatpush.msra.mxu0 0.0
  %104 = vmatpush.msra.mxu0 0.0
  %105 = vmatpush.msra.mxu0 0.0
  %106 = vmatpush.msra.mxu0 0.0
  %107 = vmatpush.msra.mxu0 0.0
  %108 = vmatpush.msra.mxu0 0.0
  %109 = vmatpush.msra.mxu0 0.0
  %110 = vmatpush.msra.mxu0 0.0
  %111 = vmatpush.msra.mxu0 0.0
  %112 = vmatpush.msra.mxu0 0.0
  %113 = vmatpush.msra.mxu0 0.0
  %114 = vmatpush.msra.mxu0 0.0
  %115 = vmatpush.msra.mxu0 0.0
  %116 = vmatpush.msra.mxu0 0.0
  %117 = vmatpush.msra.mxu0 %v98
  %118 = vmatmul.f32.gmra.mxu0 %v27
  %v119 = vpop.f32.mrf.mxu0
  %v120 = vadd.f32 0.0, %v119
  %121 = vdwg.mxu0
  %122 = vmatpush.msra.mxu0 0.0
  %123 = vmatpush.msra.mxu0 0.0
  %124 = vmatpush.msra.mxu0 0.0
  %125 = vmatpush.msra.mxu0 0.0
  %126 = vmatpush.msra.mxu0 0.0
  %127 = vmatpush.msra.mxu0 0.0
  %128 = vmatpush.msra.mxu0 0.0
  %129 = vmatpush.msra.mxu0 0.0
  %130 = vmatpush.msra.mxu0 0.0
  %131 = vmatpush.msra.mxu0 0.0
  %132 = vmatpush.msra.mxu0 0.0
  %133 = vmatpush.msra.mxu0 0.0
  %134 = vmatpush.msra.mxu0 0.0
  %135 = vmatpush.msra.mxu0 0.0
  %136 = vmatpush.msra.mxu0 0.0
  %137 = vmatpush.msra.mxu0 %v100
  %138 = vmatmul.f32.gmra.mxu0 %v27
  %v139 = vpop.f32.mrf.mxu0
  %v140 = vadd.f32 0.0, %v139
  %141 = vdwg.mxu0
  %v142 = vmul.f32 %v120, %v77
  %v143 = vmul.f32 %v140, %v77
  %v144 = vadd.f32 %v142, %v84
  %v145 = vadd.f32 %v143, %v84
  %v146 = vmax.f32 %v144, 0.0
  %v147 = vmax.f32 %v145, 0.0
  %s148 = scalar_lea.vmem %s4, 16
  %149 = vst [vmem:[%s148] sm:$0xff] %v146
  %150 = vst [vmem:[%s148 + $0x8] sm:$0xff] %v147
  // Predicated region
  $region18: #{dr_forward.3} parent=0 // pred_check
    _
  $region19: #{dr_forward.3} parent=0 // pred_check_branch
    %152 = sbr.rel (0) target = $region21
  $region20: #{dr_forward.3} parent=0 // pred_region
    _
  $region21: #{dr_forward.3} parent=0 // pred_fallthru
    _
  // Predicated region
  $region22: #{dr_forward.3} parent=0 // pred_check
    _
  $region23: #{dr_forward.3} parent=0 // pred_check_branch
    %154 = sbr.rel (0) target = $region25
  $region24: #{dr_forward.3} parent=0 // pred_region
    _
  $region25: #{dr_forward.3} parent=0 // pred_fallthru
    _

</llo_original>
